<compile_context>
chip_gen: v5e
topology: v5e:2x2
jax: 0.10.0
libtpu: 0.0.40
codegen_flags: <defaults>
</compile_context>

<pallas_src>
import math
import functools

import jax
import jax.numpy as jnp
from jax import lax
from jax.experimental import pallas as pl
from jax.experimental.pallas import tpu as pltpu

_NEG_BIG = -1e30                     # finite "minus infinity" (avoids inf-inf NaNs)
_VMEM_LIMIT = 48 * 1024 * 1024       # headroom for v7x (64 MiB / TensorCore)


def _cdiv(a, b):
    return (a + b - 1) // b


# ----------------------------- in-kernel helpers -----------------------------

def _layernorm(x, g, b, eps=1e-5):
    x = x.astype(jnp.float32)
    mu = jnp.mean(x, axis=-1, keepdims=True)
    xc = x - mu
    var = jnp.mean(xc * xc, axis=-1, keepdims=True)
    return xc * lax.rsqrt(var + eps) * g.astype(jnp.float32) + b.astype(jnp.float32)


def _gelu(x):
    # GPT-2 tanh-approximation gelu (f32 math)
    return 0.5 * x * (1.0 + jnp.tanh(0.7978845608028654 * (x + 0.044715 * x * x * x)))


# ------------------------- kernel 1: ln1 + QKV proj --------------------------

def qkv_kernel(x_ref, ln1g_ref, ln1b_ref, wattn_ref, battn_ref, q_ref, kv_ref,
               *, compute_dtype):
    D = x_ref.shape[2]
    x = x_ref[0].astype(jnp.float32)                                   # [TS, D]
    ln1 = _layernorm(x, ln1g_ref[...], ln1b_ref[...])
    # bf16 operands into the MXU, f32 accumulation
    c = jnp.dot(ln1.astype(compute_dtype), wattn_ref[...],
                preferred_element_type=jnp.float32)                    # [TS, 3D]
    c = c + battn_ref[...].astype(jnp.float32)
    q_ref[0] = c[:, 0:D].astype(q_ref.dtype)            # lane-dense [TS, D] store
    kv_ref[0, 0] = c[:, D:2 * D].astype(kv_ref.dtype)   # K
    kv_ref[0, 1] = c[:, 2 * D:3 * D].astype(kv_ref.dtype)  # V


# ------------- kernel 2: windowed flash attention + proj + MLP ---------------

def attn_mlp_kernel(n_head, local_window, nkv, mlp_chunk, compute_dtype,
                    q_ref, kv_ref, x_ref,
                    wproj_ref, bproj_ref, ln2g_ref, ln2b_ref,
                    wfc_ref, bfc_ref, wfp_ref, bfp_ref,
                    y_ref,
                    qh_sc, m_sc, l_sc, acc_sc):
    D = q_ref.shape[2]
    hd = D // n_head
    TQ = q_ref.shape[1]
    TK = kv_ref.shape[2]
    qi = pl.program_id(1)
    kj = pl.program_id(2)
    scale = 1.0 / math.sqrt(hd)

    # ---- init flash state for this (batch, q-tile) --------------------------
    @pl.when(kj == 0)
    def _init():
        qt = q_ref[0].astype(jnp.float32) * scale                      # [TQ, D]
        qh = jnp.transpose(qt.reshape(TQ, n_head, hd), (1, 0, 2))      # [H, TQ, hd]
        qh_sc[...] = qh.astype(compute_dtype)
        m_sc[...] = jnp.full(m_sc.shape, _NEG_BIG, jnp.float32)
        l_sc[...] = jnp.zeros(l_sc.shape, jnp.float32)
        acc_sc[...] = jnp.zeros(acc_sc.shape, jnp.float32)

    # KV block this step maps to (may be < 0 left of the sequence -> skip).
    kv_blk = qi - (nkv - 1) + kj

    @pl.when(kv_blk >= 0)
    def _update():
        # cast once per tile, then reshuffle in bf16 (half the relayout bytes)
        k = kv_ref[0, 0].astype(compute_dtype)                         # [TK, D]
        v = kv_ref[0, 1].astype(compute_dtype)
        kh = jnp.transpose(k.reshape(TK, n_head, hd), (1, 0, 2))       # [H, TK, hd]
        vh = jnp.transpose(v.reshape(TK, n_head, hd), (1, 0, 2))

        # head-batched QK^T (scale already folded into q), bf16 in / f32 out
        s = jnp.einsum('hqd,hkd->hqk', qh_sc[...], kh,
                       preferred_element_type=jnp.float32)             # [H, TQ, TK]

        # causal + local-window mask built from tile offsets (no [T,T] iota)
        q_pos = qi * TQ + lax.broadcasted_iota(jnp.int32, (TQ, TK), 0)
        k_pos = kv_blk * TK + lax.broadcasted_iota(jnp.int32, (TQ, TK), 1)
        allowed = (k_pos <= q_pos) & ((q_pos - k_pos) < local_window)
        s = jnp.where(allowed[None, :, :], s, _NEG_BIG)

        # online softmax update (unnormalized accumulation); m/l are [H, TQ]
        m_prev = m_sc[...]
        m_new = jnp.maximum(m_prev, jnp.max(s, axis=-1))
        alpha = jnp.exp(m_prev - m_new)
        p = jnp.exp(s - m_new[:, :, None])
        l_sc[...] = alpha * l_sc[...] + jnp.sum(p, axis=-1)
        acc_sc[...] = alpha[:, :, None] * acc_sc[...] + jnp.einsum(
            'hqk,hkd->hqd', p.astype(compute_dtype), vh,
            preferred_element_type=jnp.float32)
        m_sc[...] = m_new

    # ---- finalize: normalize, c_proj, residual, ln2, chunked MLP, residual --
    @pl.when(kj == nkv - 1)
    def _finalize():
        inv_l = pl.reciprocal(l_sc[...], approx=True)                  # [H, TQ]
        att = acc_sc[...] * inv_l[:, :, None]                          # [H, TQ, hd]
        att = jnp.transpose(att, (1, 0, 2)).reshape(TQ, D)             # once per tile
        a = jnp.dot(att.astype(compute_dtype), wproj_ref[...],
                    preferred_element_type=jnp.float32)
        a = a + bproj_ref[...].astype(jnp.float32)
        x1 = x_ref[0].astype(jnp.float32) + a                          # residual 1

        ln2 = _layernorm(x1, ln2g_ref[...], ln2b_ref[...])
        ln2c = ln2.astype(compute_dtype)

        # chunked MLP: never materialize the full [TQ, 4D] hidden
        Dff = wfc_ref.shape[1]
        m_acc = jnp.zeros((TQ, D), jnp.float32)
        for c0 in range(0, Dff, mlp_chunk):
            cw = min(mlp_chunk, Dff - c0)
            h = jnp.dot(ln2c, wfc_ref[:, c0:c0 + cw],
                        preferred_element_type=jnp.float32)            # [TQ, cw]
            h = _gelu(h + bfc_ref[:, c0:c0 + cw].astype(jnp.float32))
            m_acc = m_acc + jnp.dot(h.astype(compute_dtype),
                                    wfp_ref[c0:c0 + cw, :],
                                    preferred_element_type=jnp.float32)
        m_acc = m_acc + bfp_ref[...].astype(jnp.float32)
        y_ref[0] = (x1 + m_acc).astype(y_ref.dtype)                    # residual 2


# --------------------------------- wrapper -----------------------------------

def transformer_block(x, params, *, n_head, local_window, seq_tile=128,
                      compute_dtype=jnp.bfloat16, mlp_chunk=1024):
    (ln1g, ln1b, wattn, battn, wproj, bproj,
     ln2g, ln2b, wfc, bfc, wfp, bfp) = params
    B, T, D = x.shape
    hd = D // n_head
    Dff = wfc.shape[1]
    assert local_window >= 1

    TS = min(seq_tile, T)
    assert T % TS == 0, "sequence length must be divisible by the tile size"
    NT = T // TS

    # ---- parameter plumbing: 2-D biases / LN params, bf16 matmul weights ----
    ln1g2, ln1b2 = ln1g.reshape(1, D), ln1b.reshape(1, D)
    ln2g2, ln2b2 = ln2g.reshape(1, D), ln2b.reshape(1, D)
    battn2, bproj2 = battn.reshape(1, 3 * D), bproj.reshape(1, D)
    bfc2, bfp2 = bfc.reshape(1, Dff), bfp.reshape(1, D)
    wattn_c = wattn.astype(compute_dtype)
    wproj_c = wproj.astype(compute_dtype)
    wfc_c = wfc.astype(compute_dtype)
    wfp_c = wfp.astype(compute_dtype)

    def const(shape):
        # grid-invariant operand: constant index map + single buffer (no waste)
        nd = len(shape)
        return pl.BlockSpec(shape, lambda *_idx, _nd=nd: (0,) * _nd,
                            pipeline_mode=pl.Buffered(1))

    # ---- pass 1: q and lane-dense present (k,v stacked) ---------------------
    q, kv = pl.pallas_call(
        functools.partial(qkv_kernel, compute_dtype=compute_dtype),
        out_shape=[jax.ShapeDtypeStruct((B, T, D), x.dtype),
                   jax.ShapeDtypeStruct((B, 2, T, D), x.dtype)],
        grid_spec=pltpu.PrefetchScalarGridSpec(
            num_scalar_prefetch=0,
            grid=(B, NT),
            in_specs=[pl.BlockSpec((1, TS, D), lambda b, t: (b, t, 0)),
                      const((1, D)), const((1, D)),
                      const((D, 3 * D)), const((1, 3 * D))],
            out_specs=[pl.BlockSpec((1, TS, D), lambda b, t: (b, t, 0)),
                       pl.BlockSpec((1, 2, TS, D), lambda b, t: (b, 0, t, 0))]),
        compiler_params=pltpu.CompilerParams(
            vmem_limit_bytes=_VMEM_LIMIT,
            dimension_semantics=("parallel", "parallel")),
    )(x, ln1g2, ln1b2, wattn_c, battn2)

    # number of KV tiles that can intersect a query tile's causal local window
    NKV = min(_cdiv(max(local_window - 1, 0), TS) + 1, NT)

    def kv_map(b, qi, kj, _n=NKV):
        return (b, 0, jnp.maximum(qi - (_n - 1) + kj, 0), 0)

    chunk = min(mlp_chunk, Dff)
    kernel = functools.partial(attn_mlp_kernel, n_head, local_window, NKV,
                               chunk, compute_dtype)

    y = pl.pallas_call(
        kernel,
        out_shape=jax.ShapeDtypeStruct((B, T, D), x.dtype),
        grid_spec=pltpu.PrefetchScalarGridSpec(
            num_scalar_prefetch=0,
            grid=(B, NT, NKV),
            in_specs=[
                pl.BlockSpec((1, TS, D), lambda b, qi, kj: (b, qi, 0)),   # q
                pl.BlockSpec((1, 2, TS, D), kv_map),                      # k,v tile
                pl.BlockSpec((1, TS, D), lambda b, qi, kj: (b, qi, 0)),   # x (resid)
                const((D, D)), const((1, D)),                             # c_proj
                const((1, D)), const((1, D)),                             # ln2
                const((D, Dff)), const((1, Dff)),                         # mlp.c_fc
                const((Dff, D)), const((1, D)),                           # mlp.c_proj
            ],
            out_specs=pl.BlockSpec((1, TS, D), lambda b, qi, kj: (b, qi, 0)),
            scratch_shapes=[
                pltpu.VMEM((n_head, TS, hd), compute_dtype),  # scaled q, head-major
                pltpu.VMEM((n_head, TS), jnp.float32),        # running max
                pltpu.VMEM((n_head, TS), jnp.float32),        # running denom
                pltpu.VMEM((n_head, TS, hd), jnp.float32),    # output accumulator
            ]),
        compiler_params=pltpu.CompilerParams(
            vmem_limit_bytes=_VMEM_LIMIT,
            dimension_semantics=("parallel", "parallel", "arbitrary")),
    )(q, kv, x, wproj_c, bproj2, ln2g2, ln2b2, wfc_c, bfc2, wfp_c, bfp2)

    # layout plumbing only (head_dim < 128 -> keep lane-dense stores in-kernel,
    # do the head split as one XLA pass here): [B,2,T,D] -> [B,2,H,T,hd]
    present = kv.reshape(B, 2, T, n_head, hd).transpose(0, 1, 3, 2, 4)
    return y, present


# ----------------------------- plain-JAX reference ----------------------------

def transformer_block_ref(x, params, *, n_head, local_window):
    (ln1g, ln1b, wattn, battn, wproj, bproj,
     ln2g, ln2b, wfc, bfc, wfp, bfp) = params
    B, T, D = x.shape
    hd = D // n_head

    ln1 = _layernorm(x, ln1g, ln1b)
    c = ln1 @ wattn + battn
    q, k, v = c[..., :D], c[..., D:2 * D], c[..., 2 * D:]

    def split_heads(t):
        return t.reshape(B, T, n_head, hd).transpose(0, 2, 1, 3)

    qh, kh, vh = split_heads(q), split_heads(k), split_heads(v)
    s = jnp.einsum('bhqd,bhkd->bhqk', qh, kh) / math.sqrt(hd)
    li = lax.broadcasted_iota(jnp.int32, (T, T), 0)
    lj = lax.broadcasted_iota(jnp.int32, (T, T), 1)
    allowed = (lj <= li) & ((li - lj) < local_window)
    s = jnp.where(allowed, s, -1e9)
    p = jax.nn.softmax(s, axis=-1)
    a = jnp.einsum('bhqk,bhkd->bhqd', p, vh)
    a = a.transpose(0, 2, 1, 3).reshape(B, T, D)
    a = a @ wproj + bproj
    x1 = x + a
    ln2 = _layernorm(x1, ln2g, ln2b)
    m = _gelu(ln2 @ wfc + bfc) @ wfp + bfp
    y = x1 + m
    present = jnp.stack([kh, vh], axis=1)
    return y, present


# ----------------------------------- main -------------------------------------

if __name__ == "__main__":
    # small hparams consistent with the module
    B, T = 2, 8
    n_layer, n_head, n_embd, local_window = 4, 4, 32, 8
    D, hd = n_embd, n_embd // n_head
    scale = 1.0 / math.sqrt(n_layer)

    key = jax.random.PRNGKey(0)
    ks = jax.random.split(key, 10)

    x = jax.random.normal(ks[0], (B, T, D), jnp.float32)

    ln1g = jnp.ones((D,), jnp.float32)
    ln1b = jnp.zeros((D,), jnp.float32)
    ln2g = jnp.ones((D,), jnp.float32)
    ln2b = jnp.zeros((D,), jnp.float32)
    wattn = jax.random.normal(ks[1], (D, 3 * D), jnp.float32) * 0.02 * scale
    battn = jax.random.normal(ks[2], (3 * D,), jnp.float32) * 0.01 * scale
    wproj = jax.random.normal(ks[3], (D, D), jnp.float32) * 0.02 * scale
    bproj = jax.random.normal(ks[4], (D,), jnp.float32) * 0.01 * scale
    wfc = jax.random.normal(ks[5], (D, 4 * D), jnp.float32) * 0.02 * scale
    bfc = jax.random.normal(ks[6], (4 * D,), jnp.float32) * 0.01 * scale
    wfp = jax.random.normal(ks[7], (4 * D, D), jnp.float32) * 0.02 * scale
    bfp = jax.random.normal(ks[8], (D,), jnp.float32) * 0.01 * scale

    params = (ln1g, ln1b, wattn, battn, wproj, bproj,
              ln2g, ln2b, wfc, bfc, wfp, bfp)

    y, present = transformer_block(x, params, n_head=n_head,
                                   local_window=local_window)
    jax.block_until_ready((y, present))

    y_ref, present_ref = transformer_block_ref(x, params, n_head=n_head,
                                               local_window=local_window)
    assert y.shape == (B, T, D)
    assert present.shape == (B, 2, n_head, T, hd)
    assert jnp.allclose(y, y_ref, atol=2e-2, rtol=2e-2)
    assert jnp.allclose(present, present_ref, atol=2e-2, rtol=2e-2)

    print("KERNEL_OK")
</pallas_src>

<mosaic_0001>
module attributes {stable_mosaic.version = 11 : i64} {
  func.func @qkv_kernel(%arg0: i32, %arg1: i32, %arg2: memref<1x8x32xf32, #tpu.memory_space<vmem>>, %arg3: memref<1x32xf32, #tpu.memory_space<vmem>>, %arg4: memref<1x32xf32, #tpu.memory_space<vmem>>, %arg5: memref<32x96xbf16, #tpu.memory_space<vmem>>, %arg6: memref<1x96xf32, #tpu.memory_space<vmem>>, %arg7: memref<1x8x32xf32, #tpu.memory_space<vmem>>, %arg8: memref<1x2x8x32xf32, #tpu.memory_space<vmem>>) attributes {dimension_semantics = [#tpu.dimension_semantics<parallel>, #tpu.dimension_semantics<parallel>], iteration_bounds = array<i64: 2, 1>, scalar_prefetch = 0 : i64, scratch_operands = 0 : i64, tpu.core_type = #tpu.core_type<tc>, window_params = [{transform_indices = @transform_0, window_bounds = array<i64: 1, 8, 32>}, {pipeline_mode = #tpu.pipeline_mode<synchronous>, transform_indices = @transform_1, window_bounds = array<i64: 1, 32>}, {pipeline_mode = #tpu.pipeline_mode<synchronous>, transform_indices = @transform_2, window_bounds = array<i64: 1, 32>}, {pipeline_mode = #tpu.pipeline_mode<synchronous>, transform_indices = @transform_3, window_bounds = array<i64: 32, 96>}, {pipeline_mode = #tpu.pipeline_mode<synchronous>, transform_indices = @transform_4, window_bounds = array<i64: 1, 96>}, {transform_indices = @transform_5, window_bounds = array<i64: 1, 8, 32>}, {transform_indices = @transform_6, window_bounds = array<i64: 1, 2, 8, 32>}]} {
    %c0 = arith.constant 0 : index
    %c0_0 = arith.constant 0 : index
    %c0_1 = arith.constant 0 : index
    %0 = vector.load %arg2[%c0, %c0_0, %c0_1] : memref<1x8x32xf32, #tpu.memory_space<vmem>>, vector<1x8x32xf32>
    %1 = vector.shape_cast %0 : vector<1x8x32xf32> to vector<8x32xf32>
    %c0_2 = arith.constant 0 : index
    %c0_3 = arith.constant 0 : index
    %2 = vector.load %arg3[%c0_2, %c0_3] : memref<1x32xf32, #tpu.memory_space<vmem>>, vector<1x32xf32>
    %c0_4 = arith.constant 0 : index
    %c0_5 = arith.constant 0 : index
    %3 = vector.load %arg4[%c0_4, %c0_5] : memref<1x32xf32, #tpu.memory_space<vmem>>, vector<1x32xf32>
    %cst = arith.constant dense<0.000000e+00> : vector<8xf32>
    %4 = vector.multi_reduction <add>, %1, %cst [1] : vector<8x32xf32> to vector<8xf32>
    %5 = vector.shape_cast %4 : vector<8xf32> to vector<8x1xf32>
    %cst_6 = arith.constant 3.200000e+01 : f32
    %6 = vector.broadcast %cst_6 : f32 to vector<8x1xf32>
    %7 = arith.divf %5, %6 : vector<8x1xf32>
    %8 = vector.broadcast %7 : vector<8x1xf32> to vector<8x32xf32>
    %9 = arith.subf %1, %8 : vector<8x32xf32>
    %10 = arith.mulf %9, %9 : vector<8x32xf32>
    %cst_7 = arith.constant dense<0.000000e+00> : vector<8xf32>
    %11 = vector.multi_reduction <add>, %10, %cst_7 [1] : vector<8x32xf32> to vector<8xf32>
    %12 = vector.shape_cast %11 : vector<8xf32> to vector<8x1xf32>
    %cst_8 = arith.constant 3.200000e+01 : f32
    %13 = vector.broadcast %cst_8 : f32 to vector<8x1xf32>
    %14 = arith.divf %12, %13 : vector<8x1xf32>
    %cst_9 = arith.constant 9.99999974E-6 : f32
    %15 = vector.broadcast %cst_9 : f32 to vector<8x1xf32>
    %16 = arith.addf %14, %15 : vector<8x1xf32>
    %17 = math.rsqrt %16 : vector<8x1xf32>
    %18 = vector.broadcast %17 : vector<8x1xf32> to vector<8x32xf32>
    %19 = arith.mulf %9, %18 : vector<8x32xf32>
    %20 = vector.broadcast %2 : vector<1x32xf32> to vector<8x32xf32>
    %21 = arith.mulf %19, %20 : vector<8x32xf32>
    %22 = vector.broadcast %3 : vector<1x32xf32> to vector<8x32xf32>
    %23 = arith.addf %21, %22 : vector<8x32xf32>
    %24 = arith.truncf %23 : vector<8x32xf32> to vector<8x32xbf16>
    %c0_10 = arith.constant 0 : index
    %c0_11 = arith.constant 0 : index
    %25 = vector.load %arg5[%c0_10, %c0_11] : memref<32x96xbf16, #tpu.memory_space<vmem>>, vector<32x96xbf16>
    %cst_12 = arith.constant dense<0.000000e+00> : vector<8x96xf32>
    %26 = tpu.matmul %24, %25, %cst_12 {dimension_numbers = #tpu.dot_dimension_numbers<[1], [0], [0], [1], [0, 0, 1, 1], [], []>} : vector<8x32xbf16>, vector<32x96xbf16>, vector<8x96xf32> -> vector<8x96xf32>
    %c0_13 = arith.constant 0 : index
    %c0_14 = arith.constant 0 : index
    %27 = vector.load %arg6[%c0_13, %c0_14] : memref<1x96xf32, #tpu.memory_space<vmem>>, vector<1x96xf32>
    %28 = vector.broadcast %27 : vector<1x96xf32> to vector<8x96xf32>
    %29 = arith.addf %26, %28 : vector<8x96xf32>
    %30 = vector.extract_strided_slice %29 {offsets = [0, 0], sizes = [8, 32], strides = [1, 1]} : vector<8x96xf32> to vector<8x32xf32>
    %c0_15 = arith.constant 0 : index
    %c0_16 = arith.constant 0 : index
    %c0_17 = arith.constant 0 : index
    %31 = vector.load %arg7[%c0_15, %c0_16, %c0_17] : memref<1x8x32xf32, #tpu.memory_space<vmem>>, vector<1x8x32xf32>
    %32 = vector.shape_cast %31 : vector<1x8x32xf32> to vector<8x32xf32>
    %33 = vector.shape_cast %30 : vector<8x32xf32> to vector<1x8x32xf32>
    tpu.vector_store %arg7[%c0_15, %c0_16, %c0_17], %33 {strides = array<i32>} : memref<1x8x32xf32, #tpu.memory_space<vmem>>, vector<1x8x32xf32>,
    %34 = vector.extract_strided_slice %29 {offsets = [0, 32], sizes = [8, 32], strides = [1, 1]} : vector<8x96xf32> to vector<8x32xf32>
    %c0_18 = arith.constant 0 : index
    %c0_19 = arith.constant 0 : index
    %c0_20 = arith.constant 0 : index
    %c0_21 = arith.constant 0 : index
    %35 = vector.load %arg8[%c0_18, %c0_19, %c0_20, %c0_21] : memref<1x2x8x32xf32, #tpu.memory_space<vmem>>, vector<1x1x8x32xf32>
    %36 = vector.shape_cast %35 : vector<1x1x8x32xf32> to vector<8x32xf32>
    %37 = vector.shape_cast %34 : vector<8x32xf32> to vector<1x1x8x32xf32>
    tpu.vector_store %arg8[%c0_18, %c0_19, %c0_20, %c0_21], %37 {strides = array<i32>} : memref<1x2x8x32xf32, #tpu.memory_space<vmem>>, vector<1x1x8x32xf32>,
    %38 = vector.extract_strided_slice %29 {offsets = [0, 64], sizes = [8, 32], strides = [1, 1]} : vector<8x96xf32> to vector<8x32xf32>
    %c0_22 = arith.constant 0 : index
    %c1 = arith.constant 1 : index
    %c0_23 = arith.constant 0 : index
    %c0_24 = arith.constant 0 : index
    %39 = vector.load %arg8[%c0_22, %c1, %c0_23, %c0_24] : memref<1x2x8x32xf32, #tpu.memory_space<vmem>>, vector<1x1x8x32xf32>
    %40 = vector.shape_cast %39 : vector<1x1x8x32xf32> to vector<8x32xf32>
    %41 = vector.shape_cast %38 : vector<8x32xf32> to vector<1x1x8x32xf32>
    tpu.vector_store %arg8[%c0_22, %c1, %c0_23, %c0_24], %41 {strides = array<i32>} : memref<1x2x8x32xf32, #tpu.memory_space<vmem>>, vector<1x1x8x32xf32>,
    return
  }
  func.func @transform_0(%arg0: i32, %arg1: i32) -> (i32, i32, i32) {
    %c0_i32 = arith.constant 0 : i32
    %c0_i32_0 = arith.constant 0 : i32
    return %arg0, %arg1, %c0_i32 : i32, i32, i32
  }
  func.func @transform_1(%arg0: i32, %arg1: i32) -> (i32, i32) {
    %c0_i32 = arith.constant 0 : i32
    %c0_i32_0 = arith.constant 0 : i32
    %c0_i32_1 = arith.constant 0 : i32
    return %c0_i32, %c0_i32_0 : i32, i32
  }
  func.func @transform_2(%arg0: i32, %arg1: i32) -> (i32, i32) {
    %c0_i32 = arith.constant 0 : i32
    %c0_i32_0 = arith.constant 0 : i32
    %c0_i32_1 = arith.constant 0 : i32
    return %c0_i32, %c0_i32_0 : i32, i32
  }
  func.func @transform_3(%arg0: i32, %arg1: i32) -> (i32, i32) {
    %c0_i32 = arith.constant 0 : i32
    %c0_i32_0 = arith.constant 0 : i32
    %c0_i32_1 = arith.constant 0 : i32
    return %c0_i32, %c0_i32_0 : i32, i32
  }
  func.func @transform_4(%arg0: i32, %arg1: i32) -> (i32, i32) {
    %c0_i32 = arith.constant 0 : i32
    %c0_i32_0 = arith.constant 0 : i32
    %c0_i32_1 = arith.constant 0 : i32
    return %c0_i32, %c0_i32_0 : i32, i32
  }
  func.func @transform_5(%arg0: i32, %arg1: i32) -> (i32, i32, i32) {
    %c0_i32 = arith.constant 0 : i32
    %c0_i32_0 = arith.constant 0 : i32
    return %arg0, %arg1, %c0_i32 : i32, i32, i32
  }
  func.func @transform_6(%arg0: i32, %arg1: i32) -> (i32, i32, i32, i32) {
    %c0_i32 = arith.constant 0 : i32
    %c0_i32_0 = arith.constant 0 : i32
    %c0_i32_1 = arith.constant 0 : i32
    return %arg0, %c0_i32, %arg1, %c0_i32_0 : i32, i32, i32, i32
  }
}

</mosaic_0001>

<llo_original>
// kernel: tpu_custom_call.1
$region0: #{tpu_custom_call.1}
  #allocation0 [shape = 'u32[]', space=smem, size = 0x4, offset = 0x4, fixed_abs, tag = 'smem constant byte address 0x4 - core index']
  #allocation1 [shape = 'u32[72,128]{1,0:T(1,128)}', space=vmem, size = 0x9000, scoped, tag = 'internal scratch']
  %s0 = inlined_call_operand.hbm [shape: f32[2,8,32], index: 0, kind: input, shape index: {}]
  %s1 = inlined_call_operand.hbm [shape: f32[1,32], index: 1, kind: input, shape index: {}]
  %s2 = inlined_call_operand.vmem [shape: f32[1,32], index: 2, kind: input, shape index: {}]
  %s3 = inlined_call_operand.hbm [shape: bf16[32,96], index: 3, kind: input, shape index: {}]
  %s4 = inlined_call_operand.vmem [shape: f32[1,96], index: 4, kind: input, shape index: {}]
  %s5 = inlined_call_operand.hbm [shape: f32[2,8,32], index: 5, kind: output, shape index: {0}]
  %s6 = inlined_call_operand.hbm [shape: f32[2,2,8,32], index: 6, kind: output, shape index: {1}]
  %7 = xla_tuple %s5, %s6
  %s8 = sld [smem:[#allocation0]]
  $region73: #{tpu_custom_call.1} parent=0
    _
  %s10 = ssub.s32 1, %s8
  %s11 = scalar_select 0, %s10, %s8
  $region1: #{tpu_custom_call.1} parent=0
    #allocation2 [shape = 'u8[8192]{0}', space=vmem, size = 0x2000, scoped, tag = 'input window, operand 0']
    #allocation3 [shape = 's32[2]{0}', space=sflag, size = 0x8, scoped, tag = 'scoped memory for tpu_custom_call.1']
    #allocation4 [shape = 's32[2]{0}', space=sflag, size = 0x8, scoped, tag = 'scoped memory for tpu_custom_call.1']
    #allocation5 [shape = 'u8[512]{0}', space=vmem, size = 0x400, scoped, tag = 'input window, operand 1, single buffered']
    #allocation6 [shape = 's32[1]{0}', space=sflag, size = 0x4, scoped, tag = 'scoped memory for tpu_custom_call.1']
    #allocation7 [shape = 'u8[8192]{0}', space=vmem, size = 0x2000, scoped, tag = 'input window, operand 3, single buffered']
    #allocation8 [shape = 'u8[8192]{0}', space=vmem, size = 0x2000, scoped, tag = 'output window, operand 0']
    #allocation9 [shape = 'u8[16384]{0}', space=vmem, size = 0x4000, scoped, tag = 'output window, operand 1']
    #allocation10 [shape = 's32[2]{0}', space=sflag, size = 0x8, scoped, tag = 'scoped memory for tpu_custom_call.1']
    %12 = vsyncpa [#allocation3], 0
    %s13 = scalar_lea.sflag [#allocation3], 1
    %14 = vsyncpa %s13, 0
    %15 = vsyncpa [#allocation6], 0
    %16 = vsyncpa [#allocation4], 0
    %s17 = scalar_lea.sflag [#allocation4], 1
    %18 = vsyncpa %s17, 0
    %19 = vsyncpa [#allocation10], 0
    %s20 = scalar_lea.sflag [#allocation10], 1
    %21 = vsyncpa %s20, 0
    loop: start=0, step=1, limit=4
    $region2: #{tpu_custom_call.1} parent=1 // loop_pre_header
      _
    $region3: #{tpu_custom_call.1} parent=1 // loop_header
      %s23 = sphi 0, %s27
      %p24 = scmp.ge.s32.totalorder %s23, 4
      %s30 = sphi 0, %s42
      %s31 = sphi 0, %s38
      %s32 = sphi 0, %s30
      %s33 = sphi 0, %s31
      %s34 = sphi 0, %s32
      %s35 = sphi 0, %s33
      %s47 = sphi 0, %s49
      %s50 = sphi 0, %s47
      %s51 = sphi 0, %s50
      %s67 = sphi 0, %s51
      %s71 = sphi 0, %s71
      %s73 = sphi 0, %s71
      %s74 = sphi 0, %s73
      %s88 = sphi 0, %s74
      %s92 = sphi 0, %s92
      %s94 = sphi 0, %s92
      %s95 = sphi 0, %s94
      %s109 = sphi 0, %s95
      %s113 = sphi 0, %s113
      %s115 = sphi 0, %s113
      %s116 = sphi 0, %s115
      %s130 = sphi 0, %s116
      %s134 = sphi 0, %s134
      %s136 = sphi 0, %s134
      %s137 = sphi 0, %s136
      %s151 = sphi 0, %s137
      %s159 = sphi 0, %s161
      %s162 = sphi 0, %s159
      %s163 = sphi 0, %s162
      %s179 = sphi 0, %s163
      %s187 = sphi 0, %s189
      %s190 = sphi 0, %s187
      %s191 = sphi 0, %s190
      %s207 = sphi 0, %s191
    $region4: #{tpu_custom_call.1} parent=1 // loop_header_branch
      %26 = sbr.rel (%p24) target = $region8
    $region5: #{tpu_custom_call.1} parent=1 // loop_body
      %s28 = ssub.s32 %s23, 1
      %s29 = ssub.s32 %s23, 2
      %s36 = sadd.s32 1, %s31
      %p37 = scmp.ge.s32.totalorder %s36, 1
      %s38 = scalar_select %p37, 0, %s36
      %s39 = sadd.s32 1, %s30
      %s40 = scalar_select %p37, %s39, %s30
      %p41 = scmp.ge.s32.totalorder %s40, 2
      %s42 = scalar_select %p41, 0, %s40
      %s43 = ssub.s32 %s30, %s42
      %s44 = ssub.s32 %s31, %s38
      %s45 = sor.u32 %s43, %s44
      %p46 = scmp.eq.s32.totalorder %s45, 0
      %s48 = sadd.s32 %s47, 1
      %s49 = scalar_select %p46, %s47, %s48
      %p52 = pneg %p46
      %p53 = scmp.eq.s32.totalorder %s23, 1
      %p54 = por %p52, %p53
      %p55 = scmp.ne.s32.totalorder %s47, %s50
      %p56 = scmp.eq.s32.totalorder %s23, 0
      %p57 = por %p55, %p56
      %p58 = scmp.ne.s32.totalorder %s47, %s50
      %p59 = scmp.eq.s32.totalorder %s28, 1
      %p60 = por %p58, %p59
      %p61 = scmp.ne.s32.totalorder %s50, %s51
      %p62 = scmp.eq.s32.totalorder %s28, 0
      %p63 = por %p61, %p62
      %p64 = scmp.ne.s32.totalorder %s50, %s51
      %p65 = scmp.eq.s32.totalorder %s29, 1
      %p66 = por %p64, %p65
      %p68 = scmp.ne.s32.totalorder %s51, %s67
      %p69 = scmp.eq.s32.totalorder %s29, 0
      %p70 = por %p68, %p69
      %s72 = sadd.s32 %s71, 1
      %p75 = scmp.eq.s32.totalorder %s23, 1
      %p76 = scmp.ne.s32.totalorder %s71, %s73
      %p77 = scmp.eq.s32.totalorder %s23, 0
      %p78 = por %p76, %p77
      %p79 = scmp.ne.s32.totalorder %s71, %s73
      %p80 = scmp.eq.s32.totalorder %s28, 1
      %p81 = por %p79, %p80
      %p82 = scmp.ne.s32.totalorder %s73, %s74
      %p83 = scmp.eq.s32.totalorder %s28, 0
      %p84 = por %p82, %p83
      %p85 = scmp.ne.s32.totalorder %s73, %s74
      %p86 = scmp.eq.s32.totalorder %s29, 1
      %p87 = por %p85, %p86
      %p89 = scmp.ne.s32.totalorder %s74, %s88
      %p90 = scmp.eq.s32.totalorder %s29, 0
      %p91 = por %p89, %p90
      %s93 = sadd.s32 %s92, 1
      %p96 = scmp.eq.s32.totalorder %s23, 1
      %p97 = scmp.ne.s32.totalorder %s92, %s94
      %p98 = scmp.eq.s32.totalorder %s23, 0
      %p99 = por %p97, %p98
      %p100 = scmp.ne.s32.totalorder %s92, %s94
      %p101 = scmp.eq.s32.totalorder %s28, 1
      %p102 = por %p100, %p101
      %p103 = scmp.ne.s32.totalorder %s94, %s95
      %p104 = scmp.eq.s32.totalorder %s28, 0
      %p105 = por %p103, %p104
      %p106 = scmp.ne.s32.totalorder %s94, %s95
      %p107 = scmp.eq.s32.totalorder %s29, 1
      %p108 = por %p106, %p107
      %p110 = scmp.ne.s32.totalorder %s95, %s109
      %p111 = scmp.eq.s32.totalorder %s29, 0
      %p112 = por %p110, %p111
      %s114 = sadd.s32 %s113, 1
      %p117 = scmp.eq.s32.totalorder %s23, 1
      %p118 = scmp.ne.s32.totalorder %s113, %s115
      %p119 = scmp.eq.s32.totalorder %s23, 0
      %p120 = por %p118, %p119
      %p121 = scmp.ne.s32.totalorder %s113, %s115
      %p122 = scmp.eq.s32.totalorder %s28, 1
      %p123 = por %p121, %p122
      %p124 = scmp.ne.s32.totalorder %s115, %s116
      %p125 = scmp.eq.s32.totalorder %s28, 0
      %p126 = por %p124, %p125
      %p127 = scmp.ne.s32.totalorder %s115, %s116
      %p128 = scmp.eq.s32.totalorder %s29, 1
      %p129 = por %p127, %p128
      %p131 = scmp.ne.s32.totalorder %s116, %s130
      %p132 = scmp.eq.s32.totalorder %s29, 0
      %p133 = por %p131, %p132
      %s135 = sadd.s32 %s134, 1
      %p138 = scmp.eq.s32.totalorder %s23, 1
      %p139 = scmp.ne.s32.totalorder %s134, %s136
      %p140 = scmp.eq.s32.totalorder %s23, 0
      %p141 = por %p139, %p140
      %p142 = scmp.ne.s32.totalorder %s134, %s136
      %p143 = scmp.eq.s32.totalorder %s28, 1
      %p144 = por %p142, %p143
      %p145 = scmp.ne.s32.totalorder %s136, %s137
      %p146 = scmp.eq.s32.totalorder %s28, 0
      %p147 = por %p145, %p146
      %p148 = scmp.ne.s32.totalorder %s136, %s137
      %p149 = scmp.eq.s32.totalorder %s29, 1
      %p150 = por %p148, %p149
      %p152 = scmp.ne.s32.totalorder %s137, %s151
      %p153 = scmp.eq.s32.totalorder %s29, 0
      %p154 = por %p152, %p153
      %s155 = ssub.s32 %s30, %s42
      %s156 = ssub.s32 %s31, %s38
      %s157 = sor.u32 %s155, %s156
      %p158 = scmp.eq.s32.totalorder %s157, 0
      %s160 = sadd.s32 %s159, 1
      %s161 = scalar_select %p158, %s159, %s160
      %p164 = pneg %p158
      %p165 = scmp.eq.s32.totalorder %s23, 1
      %p166 = por %p164, %p165
      %p167 = scmp.ne.s32.totalorder %s159, %s162
      %p168 = scmp.eq.s32.totalorder %s23, 0
      %p169 = por %p167, %p168
      %p170 = scmp.ne.s32.totalorder %s159, %s162
      %p171 = scmp.eq.s32.totalorder %s28, 1
      %p172 = por %p170, %p171
      %p173 = scmp.ne.s32.totalorder %s162, %s163
      %p174 = scmp.eq.s32.totalorder %s28, 0
      %p175 = por %p173, %p174
      %p176 = scmp.ne.s32.totalorder %s162, %s163
      %p177 = scmp.eq.s32.totalorder %s29, 1
      %p178 = por %p176, %p177
      %p180 = scmp.ne.s32.totalorder %s163, %s179
      %p181 = scmp.eq.s32.totalorder %s29, 0
      %p182 = por %p180, %p181
      %s183 = ssub.s32 %s30, %s42
      %s184 = ssub.s32 %s31, %s38
      %s185 = sor.u32 %s183, %s184
      %p186 = scmp.eq.s32.totalorder %s185, 0
      %s188 = sadd.s32 %s187, 1
      %s189 = scalar_select %p186, %s187, %s188
      %p192 = pneg %p186
      %p193 = scmp.eq.s32.totalorder %s23, 1
      %p194 = por %p192, %p193
      %p195 = scmp.ne.s32.totalorder %s187, %s190
      %p196 = scmp.eq.s32.totalorder %s23, 0
      %p197 = por %p195, %p196
      %p198 = scmp.ne.s32.totalorder %s187, %s190
      %p199 = scmp.eq.s32.totalorder %s28, 1
      %p200 = por %p198, %p199
      %p201 = scmp.ne.s32.totalorder %s190, %s191
      %p202 = scmp.eq.s32.totalorder %s28, 0
      %p203 = por %p201, %p202
      %p204 = scmp.ne.s32.totalorder %s190, %s191
      %p205 = scmp.eq.s32.totalorder %s29, 1
      %p206 = por %p204, %p205
      %p208 = scmp.ne.s32.totalorder %s191, %s207
      %p209 = scmp.eq.s32.totalorder %s29, 0
      %p210 = por %p208, %p209
      %p211 = scmp.le.s32.totalorder 1, %s23
      %p212 = scmp.lt.s32.totalorder %s23, 3
      %p213 = pnand %p211, %p212
      %p214 = pneg %p213
      // Predicated region
      $region9: #{tpu_custom_call.1} parent=5 // pred_check
        _
      $region10: #{tpu_custom_call.1} parent=5 // pred_check_branch
        %216 = sbr.rel (%p213) target = $region12
      $region11: #{tpu_custom_call.1} parent=5 // pred_region
        %s217 = ssub.s32 %s23, 1
        // Predicated region
        $region13: #{tpu_custom_call.1} parent=11 // pred_check
          %p218 = pneg %p84
        $region14: #{tpu_custom_call.1} parent=11 // pred_check_branch
          %220 = sbr.rel (%p218) target = $region16
        $region15: #{tpu_custom_call.1} parent=11 // pred_region
          %222 = vsyncadd [#allocation6], 0
          %s224 = sshll.u32 %s1, 4
          %s225 = int_to_ptr.hbm [resolvable:$true] %s224
          %s226 = sshll.u32 [#allocation5], 4
          %s227 = int_to_ptr.vmem [resolvable:$true] %s226
          %229 = dma.hbm_to_vmem [thread:$0]  %s225, 16, %s227, [#allocation6]
        $region16: #{tpu_custom_call.1} parent=11 // pred_fallthru
          _
        // Predicated region
        $region17: #{tpu_custom_call.1} parent=11 // pred_check
          %p230 = pneg %p105
        $region18: #{tpu_custom_call.1} parent=11 // pred_check_branch
          %232 = sbr.rel (%p230) target = $region20
        $region19: #{tpu_custom_call.1} parent=11 // pred_region
          _
        $region20: #{tpu_custom_call.1} parent=11 // pred_fallthru
          _
        // Predicated region
        $region21: #{tpu_custom_call.1} parent=11 // pred_check
          %p233 = pneg %p126
        $region22: #{tpu_custom_call.1} parent=11 // pred_check_branch
          %235 = sbr.rel (%p233) target = $region24
        $region23: #{tpu_custom_call.1} parent=11 // pred_region
          %237 = vsyncadd [#allocation6], 0
          %s238 = sshll.u32 %s3, 4
          %s239 = int_to_ptr.hbm [resolvable:$true] %s238
          %s240 = sshll.u32 [#allocation7], 4
          %s241 = int_to_ptr.vmem [resolvable:$true] %s240
          %246 = dma.hbm_to_vmem [thread:$0]  %s239, 256, %s241, [#allocation6], 64, 64, 4
        $region24: #{tpu_custom_call.1} parent=11 // pred_fallthru
          _
        // Predicated region
        $region25: #{tpu_custom_call.1} parent=11 // pred_check
          %p247 = pneg %p147
        $region26: #{tpu_custom_call.1} parent=11 // pred_check_branch
          %249 = sbr.rel (%p247) target = $region28
        $region27: #{tpu_custom_call.1} parent=11 // pred_region
          _
        $region28: #{tpu_custom_call.1} parent=11 // pred_fallthru
          _
      $region12: #{tpu_custom_call.1} parent=5 // pred_fallthru
        _
      %p250 = scmp.lt.s32.totalorder %s23, 2
      // Predicated region
      $region29: #{tpu_custom_call.1} parent=5 // pred_check
        %p251 = pneg %p250
      $region30: #{tpu_custom_call.1} parent=5 // pred_check_branch
        %253 = sbr.rel (%p251) target = $region32
      $region31: #{tpu_custom_call.1} parent=5 // pred_region
        // Predicated region
        $region33: #{tpu_custom_call.1} parent=31 // pred_check
          %p254 = pneg %p57
        $region34: #{tpu_custom_call.1} parent=31 // pred_check_branch
          %256 = sbr.rel (%p254) target = $region36
        $region35: #{tpu_custom_call.1} parent=31 // pred_region
          %s257 = sand.u32 %s47, 1
          %s258 = scalar_lea.sflag [#allocation3], %s257
          %s259 = sand.u32 %s47, 1
          %s260 = smul.addr %s259, 8
          %s261 = scalar_lea.vmem [#allocation2], %s260
          %263 = vsyncadd %s258, 0
          %s264 = sadd.s32 %s31, %s30
          %s265 = smul.addr %s264, 8
          %s266 = scalar_lea.hbm %s0, %s265
          %s268 = sshll.u32 %s266, 4
          %s269 = int_to_ptr.hbm [resolvable:$true] %s268
          %s270 = sshll.u32 %s261, 4
          %s271 = int_to_ptr.vmem [resolvable:$true] %s270
          %273 = dma.hbm_to_vmem [thread:$0]  %s269, 128, %s271, %s258
        $region36: #{tpu_custom_call.1} parent=31 // pred_fallthru
          _
      $region32: #{tpu_custom_call.1} parent=5 // pred_fallthru
        _
      %p274 = scmp.le.s32.totalorder 1, %s23
      %p275 = scmp.lt.s32.totalorder %s23, 3
      %p276 = pnand %p274, %p275
      %p277 = pneg %p276
      // Predicated region
      $region37: #{tpu_custom_call.1} parent=5 // pred_check
        _
      $region38: #{tpu_custom_call.1} parent=5 // pred_check_branch
        %279 = sbr.rel (%p276) target = $region40
      $region39: #{tpu_custom_call.1} parent=5 // pred_region
        %s280 = ssub.s32 %s23, 1
        %s281 = sand.u32 %s50, 1
        %s282 = scalar_lea.sflag [#allocation3], %s281
        %s283 = sand.u32 %s50, 1
        %s284 = smul.addr %s283, 8
        %s285 = scalar_lea.vmem [#allocation2], %s284
        // Predicated region
        $region41: #{tpu_custom_call.1} parent=39 // pred_check
          %p286 = pneg %p63
        $region42: #{tpu_custom_call.1} parent=39 // pred_check_branch
          %288 = sbr.rel (%p286) target = $region44
        $region43: #{tpu_custom_call.1} parent=39 // pred_region
          %290 = dma.done %s282, 128
        $region44: #{tpu_custom_call.1} parent=39 // pred_fallthru
          _
        // Predicated region
        $region45: #{tpu_custom_call.1} parent=39 // pred_check
          %p291 = pneg %p84
        $region46: #{tpu_custom_call.1} parent=39 // pred_check_branch
          %293 = sbr.rel (%p291) target = $region48
        $region47: #{tpu_custom_call.1} parent=39 // pred_region
          %295 = dma.done [#allocation6], 16
        $region48: #{tpu_custom_call.1} parent=39 // pred_fallthru
          _
        // Predicated region
        $region49: #{tpu_custom_call.1} parent=39 // pred_check
          %p296 = pneg %p126
        $region50: #{tpu_custom_call.1} parent=39 // pred_check_branch
          %298 = sbr.rel (%p296) target = $region52
        $region51: #{tpu_custom_call.1} parent=39 // pred_region
          %300 = dma.done [#allocation6], 256
        $region52: #{tpu_custom_call.1} parent=39 // pred_fallthru
          _
        %s301 = sand.u32 %s50, 1
        %s302 = scalar_lea.sflag [#allocation3], %s301
        %s303 = sand.u32 %s50, 1
        %s304 = smul.addr %s303, 8
        %s305 = scalar_lea.vmem [#allocation2], %s304
        %p306 = pneg %p63
        %p307 = pneg %p60
        %p308 = pneg %p84
        %p309 = pneg %p81
        %p310 = pneg %p105
        %p311 = pneg %p102
        %p312 = pneg %p126
        %p313 = pneg %p123
        %p314 = pneg %p147
        %p315 = pneg %p144
        %p316 = pneg %p175
        %p317 = pneg %p172
        %s318 = sand.u32 %s162, 1
        %s319 = scalar_lea.sflag [#allocation4], %s318
        %s320 = sand.u32 %s162, 1
        %s321 = smul.addr %s320, 8
        %s322 = scalar_lea.vmem [#allocation8], %s321
        %p323 = pneg %p203
        %p324 = pneg %p200
        %s325 = sand.u32 %s190, 1
        %s326 = scalar_lea.sflag [#allocation10], %s325
        %s327 = sand.u32 %s190, 1
        %s328 = smul.addr %s327, 16
        %s329 = scalar_lea.vmem [#allocation9], %s328
        %v331 = vld [vmem:[%s285] sm:$0xff]
        %v332 = vld [vmem:[#allocation5] sm:$0x1]
        %v333 = vld [vmem:[%s2] sm:$0x1]
        %vm334 = vcmask 261120
        %v335 = vsel %vm334, %v331, 0.0
        %336 = vadd.xlane.f32.xlu0 %v335
        %v337 = vpop.xlane.xlu0 %336
        %v338 = vrcp.pop 32.0
        %v339 = vmul.f32 32.0, %v338
        %v340 = vsub.f32 1.0, %v339
        %v341 = vmul.f32 %v338, %v340
        %v342 = vadd.f32 %v338, %v341
        %vm343 = vweird.f32 %v338
        %v344 = vsel %vm343, %v338, %v342
        %v345 = vmul.f32 %v337, %v344
        %v346 = vsub.f32 %v331, %v345
        %v347 = vmul.f32 %v346, %v346
        %v348 = vsel %vm334, %v347, 0.0
        %349 = vadd.xlane.f32.xlu0 %v348
        %v350 = vpop.xlane.xlu0 %349
        %v351 = vmul.f32 %v350, %v344
        %v352 = vadd.f32 %v351, 1e-05
        %v353 = vrsqrt.pop %v352
        %v354 = vmul.f32 %v353, %v352
        %v355 = vmul.f32 %v354, %v353
        %v356 = vmul.f32 0.5, %v355
        %v357 = vsub.f32 1.5, %v356
        %v358 = vmul.f32 %v353, %v357
        %vm359 = vweird.f32 %v352
        %vm360 = vweird.f32 %v353
        %vm361 = vmor %vm359, %vm360
        %v362 = vsel %vm361, %v353, %v358
        %v363 = vmul.f32 %v346, %v362
        %v365 = vperm.slane %v332, 0
        %v367 = vmul.f32 %v363, %v365
        %v369 = vperm.slane %v333, 0
        %v371 = vadd.f32 %v367, %v369
        %v372 = vpack.c.bf16 %v371, %v371
        %v373 = vld [vmem:[#allocation7] sm:$0xf]
        %v374 = vld [vmem:[#allocation7 + $0x4] sm:$0xf]
        %v375 = vld [vmem:[#allocation7 + $0x8] sm:$0xf]
        %v376 = vld [vmem:[#allocation7 + $0xc] sm:$0xf]
        %v377 = vld [vmem:[%s4] sm:$0x1]
        %v379 = vperm.slane %v377, 0
        %v385 = vunpack.c.l.b16 %v373
        %v386 = vunpack.c.l.b16 %v374
        %v387 = vunpack.c.l.b16 %v375
        %v388 = vunpack.c.l.b16 %v376
        %v389 = vpack.c.b16 %v386, %v385
        %v390 = vpack.c.b16 %v388, %v387
        %v394 = vsel %vm334, %v372, 0
        %396 = vmatpush.bf16.msra.mxu0 0
        %397 = vmatpush.bf16.msra.mxu0 0
        %398 = vmatpush.bf16.msra.mxu0 0
        %399 = vmatpush.bf16.msra.mxu0 0
        %400 = vmatpush.bf16.msra.mxu0 0
        %401 = vmatpush.bf16.msra.mxu0 0
        %402 = vmatpush.bf16.msra.mxu0 %v390
        %403 = vmatpush.bf16.msra.mxu0 %v389
        %404 = vmatmul.bf16.gmra.mxu0 %v394
        %v405 = vpop.f32.mrf.mxu0
        %v406 = vadd.f32 %v379, %v405
        %v407 = vpop.f32.mrf.mxu0
        %408 = vdwg.mxu0
        %409 = vst.msk [vmem:[%s322] sm:$0xff] %vm334, %v406
        %411 = vrot.lane.b32.xlu0 %v406, 96
        %v412 = vpop.permute.xlu0 %411
        %414 = vst.msk [vmem:[%s329] sm:$0xff] %vm334, %v412
        %415 = vrot.lane.b32.xlu0 %v406, 64
        %v416 = vpop.permute.xlu0 %415
        %s418 = scalar_lea.vmem %s329, 8 [#allocation9]
        %419 = vst.msk [vmem:[%s418] sm:$0xff] %vm334, %v416
        %s420 = sand.u32 %s162, 1
        %s421 = scalar_lea.sflag [#allocation4], %s420
        %s422 = sand.u32 %s162, 1
        %s423 = smul.addr %s422, 8
        %s424 = scalar_lea.vmem [#allocation8], %s423
        %s425 = sand.u32 %s190, 1
        %s426 = scalar_lea.sflag [#allocation10], %s425
        %s427 = sand.u32 %s190, 1
        %s428 = smul.addr %s427, 16
        %s429 = scalar_lea.vmem [#allocation9], %s428
        // Predicated region
        $region53: #{tpu_custom_call.1} parent=39 // pred_check
          %p430 = pneg %p172
        $region54: #{tpu_custom_call.1} parent=39 // pred_check_branch
          %432 = sbr.rel (%p430) target = $region56
        $region55: #{tpu_custom_call.1} parent=39 // pred_region
          %434 = vsyncadd %s421, 0
          %s435 = sadd.s32 %s33, %s32
          %s436 = smul.addr %s435, 8
          %s437 = scalar_lea.hbm %s5, %s436
          %s439 = sshll.u32 %s424, 4
          %s440 = int_to_ptr.vmem [resolvable:$true] %s439
          %s441 = sshll.u32 %s437, 4
          %s442 = int_to_ptr.hbm [resolvable:$true] %s441
          %444 = dma.vmem_to_hbm [thread:$0]  %s440, 128, %s442, %s421
        $region56: #{tpu_custom_call.1} parent=39 // pred_fallthru
          _
        // Predicated region
        $region57: #{tpu_custom_call.1} parent=39 // pred_check
          %p445 = pneg %p200
        $region58: #{tpu_custom_call.1} parent=39 // pred_check_branch
          %447 = sbr.rel (%p445) target = $region60
        $region59: #{tpu_custom_call.1} parent=39 // pred_region
          %449 = vsyncadd %s426, 0
          %s450 = smul.addr %s32, 2
          %s451 = sadd.s32 %s33, %s450
          %s452 = smul.addr %s451, 8
          %s453 = scalar_lea.hbm %s6, %s452
          %s454 = sshll.u32 %s429, 4
          %s455 = int_to_ptr.vmem [resolvable:$true] %s454
          %s456 = sshll.u32 %s453, 4
          %s457 = int_to_ptr.hbm [resolvable:$true] %s456
          %462 = dma.vmem_to_hbm [thread:$0]  %s455, 256, %s457, %s426, 128, 128, 8
        $region60: #{tpu_custom_call.1} parent=39 // pred_fallthru
          _
      $region40: #{tpu_custom_call.1} parent=5 // pred_fallthru
        _
      %p463 = scmp.le.s32.totalorder 2, %s23
      // Predicated region
      $region61: #{tpu_custom_call.1} parent=5 // pred_check
        %p464 = pneg %p463
      $region62: #{tpu_custom_call.1} parent=5 // pred_check_branch
        %466 = sbr.rel (%p464) target = $region64
      $region63: #{tpu_custom_call.1} parent=5 // pred_region
        %s467 = ssub.s32 %s23, 2
        // Predicated region
        $region65: #{tpu_custom_call.1} parent=63 // pred_check
          %p468 = pneg %p178
        $region66: #{tpu_custom_call.1} parent=63 // pred_check_branch
          %470 = sbr.rel (%p468) target = $region68
        $region67: #{tpu_custom_call.1} parent=63 // pred_region
          %s471 = sand.u32 %s163, 1
          %s472 = scalar_lea.sflag [#allocation4], %s471
          %s473 = sand.u32 %s163, 1
          %s474 = smul.addr %s473, 8
          %s475 = scalar_lea.vmem [#allocation8], %s474
          %477 = dma.done %s472, 128
        $region68: #{tpu_custom_call.1} parent=63 // pred_fallthru
          _
        // Predicated region
        $region69: #{tpu_custom_call.1} parent=63 // pred_check
          %p478 = pneg %p206
        $region70: #{tpu_custom_call.1} parent=63 // pred_check_branch
          %480 = sbr.rel (%p478) target = $region72
        $region71: #{tpu_custom_call.1} parent=63 // pred_region
          %s481 = sand.u32 %s191, 1
          %s482 = scalar_lea.sflag [#allocation10], %s481
          %s483 = sand.u32 %s191, 1
          %s484 = smul.addr %s483, 16
          %s485 = scalar_lea.vmem [#allocation9], %s484
          %487 = dma.done %s482, 256
        $region72: #{tpu_custom_call.1} parent=63 // pred_fallthru
          _
      $region64: #{tpu_custom_call.1} parent=5 // pred_fallthru
        _
    $region6: #{tpu_custom_call.1} parent=1 // loop_footer
      %s27 = sadd.s32 1, %s23
    $region7: #{tpu_custom_call.1} parent=1 // loop_footer_branch
      %22 = sbr.rel target = $region3
    $region8: #{tpu_custom_call.1} parent=1 // loop_exit
      _
    %488 = vsyncpa [#allocation3], 1
    %s489 = scalar_lea.sflag [#allocation3], 1
    %490 = vsyncpa %s489, 1
    %491 = vsyncpa [#allocation6], 1
    %492 = vsyncpa [#allocation4], 1
    %s493 = scalar_lea.sflag [#allocation4], 1
    %494 = vsyncpa %s493, 1
    %495 = vsyncpa [#allocation10], 1
    %s496 = scalar_lea.sflag [#allocation10], 1
    %497 = vsyncpa %s496, 1

</llo_original>
